<compile_context>
chip_gen: v6e
topology: v6e:2x2x1
jax: 0.10.0
libtpu: 0.0.40
codegen_flags: <defaults>
</compile_context>

<pallas_src>
import jax
import jax.numpy as jnp
import numpy as np
from jax.experimental import pallas as pl
from jax.experimental.pallas import tpu as pltpu

# ---------------- static module configuration ----------------
IN_FEATURES = 32
OUT_FEATURES = 16
HYPERS = [8, 4]
HYPOS = [6]
T = 1.0
FINAL_RELU = True
MULTI_POSITION = 2

STANDARD = IN_FEATURES - sum(HYPERS + HYPOS)
SLICE_SIZES = HYPERS + HYPOS + [STANDARD]           # per-group input slice widths
KINDS = ["hyper"] * len(HYPERS) + ["hypo"] * len(HYPOS) + ["standard"]
G = len(SLICE_SIZES)                                # number of groups
M = MULTI_POSITION                                  # number of positions
SUB_SIZES = [OUT_FEATURES // M] * (M - 1) + [
    OUT_FEATURES - (OUT_FEATURES // M) * (M - 1)
]                                                   # output block per position
CIRC_STEP = min(sum(HYPERS), 1)
SHIFTS = [m * CIRC_STEP for m in range(M)]          # circular_offset == 0
MAX_SLICE = max(SLICE_SIZES)
MAX_SUB = max(SUB_SIZES)


def _round_up(x, m):
    return ((x + m - 1) // m) * m


# Fused-weight column layout: column = (g * M + m) * MAX_SUB + s   (g-major).
VALID_COLS = G * M * MAX_SUB                        # 64
PADDED_COLS = max(128, _round_up(VALID_COLS, 128))  # lane-dense (128)
NUM_HYPER_COLS = len(HYPERS) * M * MAX_SUB          # hyper groups are first
NUM_HYPO_COLS = len(HYPOS) * M * MAX_SUB
HYPER_END = NUM_HYPER_COLS                          # cols [0, HYPER_END)  -> hyper
HYPO_END = HYPER_END + NUM_HYPO_COLS                # cols [HYPER_END, HYPO_END) -> hypo
STD_END = VALID_COLS                                # cols [HYPO_END, STD_END)  -> standard


# ---------------- Pallas kernel ----------------
def dendric_kernel(x_ref, w_ref, b_ref, o_ref):
    x = x_ref[...].astype(jnp.float32)                      # (bb, IN_FEATURES)
    # One fused lane-dense matmul for every (position, group) linear.
    y = jnp.dot(x, w_ref[...], preferred_element_type=jnp.float32)
    y = y + b_ref[...]                                      # (bb, PADDED_COLS)

    # Per-column activation kind masks (static lane ranges via 2-D iota).
    col = jax.lax.broadcasted_iota(jnp.int32, (1, PADDED_COLS), 1)
    hyper_m = (col < HYPER_END).astype(jnp.float32)
    hypo_m = ((col >= HYPER_END) & (col < HYPO_END)).astype(jnp.float32)
    std_m = ((col >= HYPO_END) & (col < STD_END)).astype(jnp.float32)

    hyper_v = jnp.where(y >= jnp.float32(T / 2), jnp.float32(T), jnp.float32(0.0))
    hypo_v = jnp.clip(y, 0.0, jnp.float32(T / 2))
    act = hyper_m * hyper_v + hypo_m * hypo_v + std_m * y   # (bb, PADDED_COLS)

    # Sum over groups: chunks of width M*MAX_SUB, already in [position, sub] order.
    width = M * MAX_SUB
    r = act[:, 0:width]
    for g in range(1, G):                                   # static unrolled
        r = r + act[:, g * width:(g + 1) * width]

    if OUT_FEATURES != M * MAX_SUB:                         # general fallback
        r = jnp.concatenate(
            [r[:, m * MAX_SUB:m * MAX_SUB + SUB_SIZES[m]] for m in range(M)],
            axis=1)

    if FINAL_RELU:
        r = jnp.maximum(r, 0.0)
    o_ref[...] = r.astype(o_ref.dtype)


def dendric_linear(x, w_all, b_all, *, block_b=1024):
    """x: (B, IN_FEATURES); w_all: (IN_FEATURES, PADDED_COLS); b_all: (1, PADDED_COLS)."""
    B = x.shape[0]
    # Batch tile: large (default 1024) but never bigger than the (rounded) batch;
    # always a multiple of 8 to satisfy the (8,128) block constraint.
    bb = _round_up(min(block_b, _round_up(B, 8)), 8)
    Bp = _round_up(B, bb)
    if Bp != B:
        x = jnp.pad(x, ((0, Bp - B), (0, 0)))
    grid = (Bp // bb,)
    out = pl.pallas_call(
        dendric_kernel,
        out_shape=jax.ShapeDtypeStruct((Bp, OUT_FEATURES), x.dtype),
        grid=grid,
        in_specs=[
            pl.BlockSpec((bb, IN_FEATURES), lambda i: (i, 0)),
            pl.BlockSpec((IN_FEATURES, PADDED_COLS), lambda i: (0, 0)),
            pl.BlockSpec((1, PADDED_COLS), lambda i: (0, 0)),
        ],
        out_specs=pl.BlockSpec((bb, OUT_FEATURES), lambda i: (i, 0)),
        compiler_params=pltpu.CompilerParams(dimension_semantics=("parallel",)),
    )(x, w_all, b_all)
    return out[:B]


# ---------------- deterministic parameter init (PyTorch-like uniform) ----------------
def init_raw_params(key):
    """Per-(position, group) weights W[m][g]: (slice, sub) and biases b[m][g]: (sub,)."""
    keys = jax.random.split(key, 2 * M * G)
    Ws, bs = [], []
    k = 0
    for m in range(M):
        sub = SUB_SIZES[m]
        Wm, bm = [], []
        for g in range(G):
            fan_in = SLICE_SIZES[g]
            bound = 1.0 / np.sqrt(fan_in)
            Wm.append(jax.random.uniform(keys[k], (fan_in, sub), jnp.float32,
                                         -bound, bound)); k += 1
            bm.append(jax.random.uniform(keys[k], (sub,), jnp.float32,
                                         -bound, bound)); k += 1
        Ws.append(Wm)
        bs.append(bm)
    return Ws, bs


def pack_params(Ws, bs):
    """Pack all per-(m,g) linears into one lane-dense (IN, PADDED_COLS) weight
    matrix with the circular shift folded into the input-row placement, plus a
    (1, PADDED_COLS) bias row.  Padded entries are exactly zero."""
    W_all = np.zeros((IN_FEATURES, PADDED_COLS), np.float32)
    b_all = np.zeros((1, PADDED_COLS), np.float32)
    for m in range(M):
        c = SHIFTS[m] % IN_FEATURES
        sub = SUB_SIZES[m]
        idx = 0
        for g in range(G):
            size = SLICE_SIZES[g]
            col0 = (g * M + m) * MAX_SUB
            w = np.asarray(Ws[m][g])                 # (size, sub)
            b = np.asarray(bs[m][g])                 # (sub,)
            for j in range(size):
                row = (idx + j + c) % IN_FEATURES    # fold circular shift
                W_all[row, col0:col0 + sub] = w[j]
            b_all[0, col0:col0 + sub] = b
            idx += size
    return jnp.asarray(W_all), jnp.asarray(b_all)


# ---------------- pure-JAX reference (mirrors the PyTorch forward) ----------------
def reference(x, Ws, bs):
    groups = [[] for _ in range(G)]
    for m in range(M):
        c = SHIFTS[m] % IN_FEATURES
        xs = x if c == 0 else jnp.concatenate([x[:, c:], x[:, :c]], axis=1)
        idx = 0
        for g in range(G):
            size = SLICE_SIZES[g]
            y = xs[:, idx:idx + size] @ Ws[m][g] + bs[m][g]
            if KINDS[g] == "hyper":
                y = jnp.where(y >= T / 2, T, 0.0)
            elif KINDS[g] == "hypo":
                y = jnp.clip(y, 0.0, T / 2)
            groups[g].append(y)
            idx += size
    out = sum(jnp.concatenate(gl, axis=1) for gl in groups)
    if FINAL_RELU:
        out = jnp.maximum(out, 0.0)
    return out


if __name__ == "__main__":
    key = jax.random.PRNGKey(0)
    kx, kp = jax.random.split(key)
    B = 100   # small test batch, deliberately not a multiple of the block size
    x = jax.random.normal(kx, (B, IN_FEATURES), jnp.float32)
    Ws, bs = init_raw_params(kp)
    W_all, b_all = pack_params(Ws, bs)

    # Small block here so the test exercises batch padding and a multi-step
    # "parallel" grid; production batches should use the default block_b=1024.
    out = dendric_linear(x, W_all, b_all, block_b=32)
    out = jax.block_until_ready(out)

    ref = jax.block_until_ready(reference(x, Ws, bs))
    np.testing.assert_allclose(np.asarray(out), np.asarray(ref),
                               rtol=1e-5, atol=1e-5)
    print("KERNEL_OK")
</pallas_src>

<mosaic_0001>
module attributes {stable_mosaic.version = 11 : i64} {
  func.func @dendric_kernel(%arg0: i32, %arg1: memref<32x32xf32, #tpu.memory_space<vmem>>, %arg2: memref<32x128xf32, #tpu.memory_space<vmem>>, %arg3: memref<1x128xf32, #tpu.memory_space<vmem>>, %arg4: memref<32x16xf32, #tpu.memory_space<vmem>>) attributes {dimension_semantics = [#tpu.dimension_semantics<parallel>], iteration_bounds = array<i64: 4>, scalar_prefetch = 0 : i64, scratch_operands = 0 : i64, tpu.core_type = #tpu.core_type<tc>, window_params = [{transform_indices = @transform_0, window_bounds = array<i64: 32, 32>}, {pipeline_mode = #tpu.pipeline_mode<synchronous>, transform_indices = @transform_1, window_bounds = array<i64: 32, 128>}, {pipeline_mode = #tpu.pipeline_mode<synchronous>, transform_indices = @transform_2, window_bounds = array<i64: 1, 128>}, {transform_indices = @transform_3, window_bounds = array<i64: 32, 16>}]} {
    %c0 = arith.constant 0 : index
    %c0_0 = arith.constant 0 : index
    %0 = vector.load %arg1[%c0, %c0_0] : memref<32x32xf32, #tpu.memory_space<vmem>>, vector<32x32xf32>
    %c0_1 = arith.constant 0 : index
    %c0_2 = arith.constant 0 : index
    %1 = vector.load %arg2[%c0_1, %c0_2] : memref<32x128xf32, #tpu.memory_space<vmem>>, vector<32x128xf32>
    %cst = arith.constant dense<0.000000e+00> : vector<32x128xf32>
    %2 = tpu.matmul %0, %1, %cst {dimension_numbers = #tpu.dot_dimension_numbers<[1], [0], [0], [1], [0, 0, 1, 1], [], []>} : vector<32x32xf32>, vector<32x128xf32>, vector<32x128xf32> -> vector<32x128xf32>
    %c0_3 = arith.constant 0 : index
    %c0_4 = arith.constant 0 : index
    %3 = vector.load %arg3[%c0_3, %c0_4] : memref<1x128xf32, #tpu.memory_space<vmem>>, vector<1x128xf32>
    %4 = vector.broadcast %3 : vector<1x128xf32> to vector<32x128xf32>
    %5 = arith.addf %2, %4 : vector<32x128xf32>
    %6 = tpu.iota {dimensions = array<i32: 1>} : vector<1x128xi32>
    %c32_i32 = arith.constant 32 : i32
    %7 = vector.broadcast %c32_i32 : i32 to vector<1x128xi32>
    %8 = arith.cmpi slt, %6, %7 : vector<1x128xi32>
    %9 = arith.extui %8 : vector<1x128xi1> to vector<1x128xi32>
    %10 = arith.sitofp %9 : vector<1x128xi32> to vector<1x128xf32>
    %c32_i32_5 = arith.constant 32 : i32
    %11 = vector.broadcast %c32_i32_5 : i32 to vector<1x128xi32>
    %12 = arith.cmpi sge, %6, %11 : vector<1x128xi32>
    %c48_i32 = arith.constant 48 : i32
    %13 = vector.broadcast %c48_i32 : i32 to vector<1x128xi32>
    %14 = arith.cmpi slt, %6, %13 : vector<1x128xi32>
    %15 = arith.andi %12, %14 : vector<1x128xi1>
    %16 = arith.extui %15 : vector<1x128xi1> to vector<1x128xi32>
    %17 = arith.sitofp %16 : vector<1x128xi32> to vector<1x128xf32>
    %c48_i32_6 = arith.constant 48 : i32
    %18 = vector.broadcast %c48_i32_6 : i32 to vector<1x128xi32>
    %19 = arith.cmpi sge, %6, %18 : vector<1x128xi32>
    %c64_i32 = arith.constant 64 : i32
    %20 = vector.broadcast %c64_i32 : i32 to vector<1x128xi32>
    %21 = arith.cmpi slt, %6, %20 : vector<1x128xi32>
    %22 = arith.andi %19, %21 : vector<1x128xi1>
    %23 = arith.extui %22 : vector<1x128xi1> to vector<1x128xi32>
    %24 = arith.sitofp %23 : vector<1x128xi32> to vector<1x128xf32>
    %cst_7 = arith.constant 5.000000e-01 : f32
    %25 = vector.broadcast %cst_7 : f32 to vector<32x128xf32>
    %26 = arith.cmpf oge, %5, %25 : vector<32x128xf32>
    %cst_8 = arith.constant 1.000000e+00 : f32
    %cst_9 = arith.constant 0.000000e+00 : f32
    %27 = vector.broadcast %cst_8 : f32 to vector<32x128xf32>
    %28 = vector.broadcast %cst_9 : f32 to vector<32x128xf32>
    %29 = arith.select %26, %27, %28 : vector<32x128xi1>, vector<32x128xf32>
    %cst_10 = arith.constant 0.000000e+00 : f32
    %cst_11 = arith.constant 5.000000e-01 : f32
    %30 = vector.broadcast %cst_10 : f32 to vector<32x128xf32>
    %31 = arith.maximumf %30, %5 : vector<32x128xf32>
    %32 = vector.broadcast %cst_11 : f32 to vector<32x128xf32>
    %33 = arith.minimumf %32, %31 : vector<32x128xf32>
    %34 = vector.broadcast %10 : vector<1x128xf32> to vector<32x128xf32>
    %35 = arith.mulf %34, %29 : vector<32x128xf32>
    %36 = vector.broadcast %17 : vector<1x128xf32> to vector<32x128xf32>
    %37 = arith.mulf %36, %33 : vector<32x128xf32>
    %38 = arith.addf %35, %37 : vector<32x128xf32>
    %39 = vector.broadcast %24 : vector<1x128xf32> to vector<32x128xf32>
    %40 = arith.mulf %39, %5 : vector<32x128xf32>
    %41 = arith.addf %38, %40 : vector<32x128xf32>
    %42 = vector.extract_strided_slice %41 {offsets = [0, 0], sizes = [32, 16], strides = [1, 1]} : vector<32x128xf32> to vector<32x16xf32>
    %43 = vector.extract_strided_slice %41 {offsets = [0, 16], sizes = [32, 16], strides = [1, 1]} : vector<32x128xf32> to vector<32x16xf32>
    %44 = arith.addf %42, %43 : vector<32x16xf32>
    %45 = vector.extract_strided_slice %41 {offsets = [0, 32], sizes = [32, 16], strides = [1, 1]} : vector<32x128xf32> to vector<32x16xf32>
    %46 = arith.addf %44, %45 : vector<32x16xf32>
    %47 = vector.extract_strided_slice %41 {offsets = [0, 48], sizes = [32, 16], strides = [1, 1]} : vector<32x128xf32> to vector<32x16xf32>
    %48 = arith.addf %46, %47 : vector<32x16xf32>
    %cst_12 = arith.constant 0.000000e+00 : f32
    %49 = vector.broadcast %cst_12 : f32 to vector<32x16xf32>
    %50 = arith.maximumf %48, %49 : vector<32x16xf32>
    %c0_13 = arith.constant 0 : index
    %c0_14 = arith.constant 0 : index
    %51 = vector.load %arg4[%c0_13, %c0_14] : memref<32x16xf32, #tpu.memory_space<vmem>>, vector<32x16xf32>
    tpu.vector_store %arg4[%c0_13, %c0_14], %50 {strides = array<i32>} : memref<32x16xf32, #tpu.memory_space<vmem>>, vector<32x16xf32>,
    return
  }
  func.func @transform_0(%arg0: i32) -> (i32, i32) {
    %c0_i32 = arith.constant 0 : i32
    %c0_i32_0 = arith.constant 0 : i32
    return %arg0, %c0_i32 : i32, i32
  }
  func.func @transform_1(%arg0: i32) -> (i32, i32) {
    %c0_i32 = arith.constant 0 : i32
    %c0_i32_0 = arith.constant 0 : i32
    %c0_i32_1 = arith.constant 0 : i32
    return %c0_i32, %c0_i32_0 : i32, i32
  }
  func.func @transform_2(%arg0: i32) -> (i32, i32) {
    %c0_i32 = arith.constant 0 : i32
    %c0_i32_0 = arith.constant 0 : i32
    %c0_i32_1 = arith.constant 0 : i32
    return %c0_i32, %c0_i32_0 : i32, i32
  }
  func.func @transform_3(%arg0: i32) -> (i32, i32) {
    %c0_i32 = arith.constant 0 : i32
    %c0_i32_0 = arith.constant 0 : i32
    return %arg0, %c0_i32 : i32, i32
  }
}

</mosaic_0001>

<llo_original>
// kernel: tpu_custom_call.1
$region0: #{tpu_custom_call.1}
  #allocation0 [shape = 'u32[]', space=smem, size = 0x4, offset = 0x4, fixed_abs, tag = 'smem constant byte address 0x4 - core index']
  #allocation1 [shape = 'u32[144,128]{1,0:T(1,128)}', space=vmem, size = 0x12000, scoped, tag = 'internal scratch']
  %s0 = inlined_call_operand.vmem [shape: f32[128,32], index: 0, kind: input, shape index: {}]
  %s1 = inlined_call_operand.vmem [shape: f32[32,128], index: 1, kind: input, shape index: {}]
  %s2 = inlined_call_operand.vmem [shape: f32[1,128], index: 2, kind: input, shape index: {}]
  %s3 = inlined_call_operand.vmem [shape: f32[128,16], index: 3, kind: output, shape index: {}]
  %s4 = sld [smem:[#allocation0]]
  $region45: #{tpu_custom_call.1} parent=0
    _
  %s6 = ssub.s32 1, %s4
  %s7 = scalar_select 0, %s6, %s4
  loop: start=0, step=1, limit=6
  $region2: #{tpu_custom_call.1} parent=0 // loop_pre_header
    _
  $region3: #{tpu_custom_call.1} parent=0 // loop_header
    %s9 = sphi 0, %s13
    %p10 = scmp.ge.s32.totalorder %s9, 6
    %s19 = sphi 0, %s21
    %s22 = sphi 0, %s19
    %s23 = sphi 0, %s22
    %s39 = sphi 0, %s23
    %s43 = sphi 0, %s43
    %s45 = sphi 0, %s43
    %s46 = sphi 0, %s45
    %s60 = sphi 0, %s46
    %s64 = sphi 0, %s64
    %s66 = sphi 0, %s64
    %s67 = sphi 0, %s66
    %s81 = sphi 0, %s67
    %s87 = sphi 0, %s89
    %s90 = sphi 0, %s87
    %s91 = sphi 0, %s90
    %s107 = sphi 0, %s91
  $region4: #{tpu_custom_call.1} parent=0 // loop_header_branch
    %12 = sbr.rel (%p10) target = $region8
  $region5: #{tpu_custom_call.1} parent=0 // loop_body
    %s14 = ssub.s32 %s9, 1
    %s15 = ssub.s32 %s9, 2
    %s16 = sadd.s32 %s9, 1
    %s17 = ssub.s32 %s9, %s16
    %p18 = scmp.eq.s32.totalorder %s17, 0
    %s20 = sadd.s32 %s19, 1
    %s21 = scalar_select %p18, %s19, %s20
    %p24 = pneg %p18
    %p25 = scmp.eq.s32.totalorder %s9, 3
    %p26 = por %p24, %p25
    %p27 = scmp.ne.s32.totalorder %s19, %s22
    %p28 = scmp.eq.s32.totalorder %s9, 0
    %p29 = por %p27, %p28
    %p30 = scmp.ne.s32.totalorder %s19, %s22
    %p31 = scmp.eq.s32.totalorder %s14, 3
    %p32 = por %p30, %p31
    %p33 = scmp.ne.s32.totalorder %s22, %s23
    %p34 = scmp.eq.s32.totalorder %s14, 0
    %p35 = por %p33, %p34
    %p36 = scmp.ne.s32.totalorder %s22, %s23
    %p37 = scmp.eq.s32.totalorder %s15, 3
    %p38 = por %p36, %p37
    %p40 = scmp.ne.s32.totalorder %s23, %s39
    %p41 = scmp.eq.s32.totalorder %s15, 0
    %p42 = por %p40, %p41
    %s44 = sadd.s32 %s43, 1
    %p47 = scmp.eq.s32.totalorder %s9, 3
    %p48 = scmp.ne.s32.totalorder %s43, %s45
    %p49 = scmp.eq.s32.totalorder %s9, 0
    %p50 = por %p48, %p49
    %p51 = scmp.ne.s32.totalorder %s43, %s45
    %p52 = scmp.eq.s32.totalorder %s14, 3
    %p53 = por %p51, %p52
    %p54 = scmp.ne.s32.totalorder %s45, %s46
    %p55 = scmp.eq.s32.totalorder %s14, 0
    %p56 = por %p54, %p55
    %p57 = scmp.ne.s32.totalorder %s45, %s46
    %p58 = scmp.eq.s32.totalorder %s15, 3
    %p59 = por %p57, %p58
    %p61 = scmp.ne.s32.totalorder %s46, %s60
    %p62 = scmp.eq.s32.totalorder %s15, 0
    %p63 = por %p61, %p62
    %s65 = sadd.s32 %s64, 1
    %p68 = scmp.eq.s32.totalorder %s9, 3
    %p69 = scmp.ne.s32.totalorder %s64, %s66
    %p70 = scmp.eq.s32.totalorder %s9, 0
    %p71 = por %p69, %p70
    %p72 = scmp.ne.s32.totalorder %s64, %s66
    %p73 = scmp.eq.s32.totalorder %s14, 3
    %p74 = por %p72, %p73
    %p75 = scmp.ne.s32.totalorder %s66, %s67
    %p76 = scmp.eq.s32.totalorder %s14, 0
    %p77 = por %p75, %p76
    %p78 = scmp.ne.s32.totalorder %s66, %s67
    %p79 = scmp.eq.s32.totalorder %s15, 3
    %p80 = por %p78, %p79
    %p82 = scmp.ne.s32.totalorder %s67, %s81
    %p83 = scmp.eq.s32.totalorder %s15, 0
    %p84 = por %p82, %p83
    %s85 = ssub.s32 %s9, %s16
    %p86 = scmp.eq.s32.totalorder %s85, 0
    %s88 = sadd.s32 %s87, 1
    %s89 = scalar_select %p86, %s87, %s88
    %p92 = pneg %p86
    %p93 = scmp.eq.s32.totalorder %s9, 3
    %p94 = por %p92, %p93
    %p95 = scmp.ne.s32.totalorder %s87, %s90
    %p96 = scmp.eq.s32.totalorder %s9, 0
    %p97 = por %p95, %p96
    %p98 = scmp.ne.s32.totalorder %s87, %s90
    %p99 = scmp.eq.s32.totalorder %s14, 3
    %p100 = por %p98, %p99
    %p101 = scmp.ne.s32.totalorder %s90, %s91
    %p102 = scmp.eq.s32.totalorder %s14, 0
    %p103 = por %p101, %p102
    %p104 = scmp.ne.s32.totalorder %s90, %s91
    %p105 = scmp.eq.s32.totalorder %s15, 3
    %p106 = por %p104, %p105
    %p108 = scmp.ne.s32.totalorder %s91, %s107
    %p109 = scmp.eq.s32.totalorder %s15, 0
    %p110 = por %p108, %p109
    %p111 = scmp.le.s32.totalorder 1, %s9
    %p112 = scmp.lt.s32.totalorder %s9, 5
    %p113 = pnand %p111, %p112
    %p114 = pneg %p113
    // Predicated region
    $region9: #{tpu_custom_call.1} parent=5 // pred_check
      _
    $region10: #{tpu_custom_call.1} parent=5 // pred_check_branch
      %116 = sbr.rel (%p113) target = $region12
    $region11: #{tpu_custom_call.1} parent=5 // pred_region
      %s117 = ssub.s32 %s9, 1
      // Predicated region
      $region13: #{tpu_custom_call.1} parent=11 // pred_check
        %p118 = pneg %p56
      $region14: #{tpu_custom_call.1} parent=11 // pred_check_branch
        %120 = sbr.rel (%p118) target = $region16
      $region15: #{tpu_custom_call.1} parent=11 // pred_region
        _
      $region16: #{tpu_custom_call.1} parent=11 // pred_fallthru
        _
      // Predicated region
      $region17: #{tpu_custom_call.1} parent=11 // pred_check
        %p121 = pneg %p77
      $region18: #{tpu_custom_call.1} parent=11 // pred_check_branch
        %123 = sbr.rel (%p121) target = $region20
      $region19: #{tpu_custom_call.1} parent=11 // pred_region
        _
      $region20: #{tpu_custom_call.1} parent=11 // pred_fallthru
        _
    $region12: #{tpu_custom_call.1} parent=5 // pred_fallthru
      _
    %p124 = scmp.lt.s32.totalorder %s9, 4
    // Predicated region
    $region21: #{tpu_custom_call.1} parent=5 // pred_check
      %p125 = pneg %p124
    $region22: #{tpu_custom_call.1} parent=5 // pred_check_branch
      %127 = sbr.rel (%p125) target = $region24
    $region23: #{tpu_custom_call.1} parent=5 // pred_region
      // Predicated region
      $region25: #{tpu_custom_call.1} parent=23 // pred_check
        %p128 = pneg %p29
      $region26: #{tpu_custom_call.1} parent=23 // pred_check_branch
        %130 = sbr.rel (%p128) target = $region28
      $region27: #{tpu_custom_call.1} parent=23 // pred_region
        %s131 = smul.u32 4, %s9
        %p132 = scmp.lt.s32.totalorder %s131, 15
        %s133 = scalar_select %p132, %s131, 15
        %s134 = smul.addr %s133, 8
        %s135 = scalar_lea.vmem %s0, %s134
        %s136 = smul.u32 4, %s9
      $region28: #{tpu_custom_call.1} parent=23 // pred_fallthru
        _
    $region24: #{tpu_custom_call.1} parent=5 // pred_fallthru
      _
    %p137 = scmp.le.s32.totalorder 1, %s9
    %p138 = scmp.lt.s32.totalorder %s9, 5
    %p139 = pnand %p137, %p138
    %p140 = pneg %p139
    // Predicated region
    $region29: #{tpu_custom_call.1} parent=5 // pred_check
      _
    $region30: #{tpu_custom_call.1} parent=5 // pred_check_branch
      %142 = sbr.rel (%p139) target = $region32
    $region31: #{tpu_custom_call.1} parent=5 // pred_region
      %s143 = ssub.s32 %s9, 1
      %s144 = smul.u32 4, %s14
      %p145 = scmp.lt.s32.totalorder %s144, 15
      %s146 = scalar_select %p145, %s144, 15
      %s147 = smul.addr %s146, 8
      %s148 = scalar_lea.vmem %s0, %s147
      %p149 = pneg %p35
      %p150 = pneg %p32
      %p151 = pneg %p56
      %p152 = pneg %p53
      %p153 = pneg %p77
      %p154 = pneg %p74
      %p155 = pneg %p103
      %p156 = pneg %p100
      %s157 = smul.u32 4, %s14
      %p158 = scmp.lt.s32.totalorder %s157, 15
      %s159 = scalar_select %p158, %s157, 15
      %s160 = smul.addr %s159, 8
      %s161 = scalar_lea.vmem %s3, %s160
      %s162 = smul.u32 4, %s14
      %p163 = scmp.lt.s32.totalorder %s162, 15
      %s164 = scalar_select %p163, %s162, 15
      %s165 = smul.addr %s164, 8
      %s166 = scalar_lea.vmem %s0, %s165
      %s167 = smul.u32 4, %s14
      %s168 = smul.u32 4, %s14
      %p169 = scmp.lt.s32.totalorder %s168, 15
      %s170 = scalar_select %p169, %s168, 15
      %s171 = smul.addr %s170, 8
      %s172 = scalar_lea.vmem %s3, %s171
      %s173 = smul.u32 4, %s14
      %v174 = vld [vmem:[%s166] sm:$0xff]
      %v175 = vld [vmem:[%s166 + $0x8] sm:$0xff]
      %v176 = vld [vmem:[%s166 + $0x10] sm:$0xff]
      %v177 = vld [vmem:[%s166 + $0x18] sm:$0xff]
      %v178 = vld [vmem:[%s1] sm:$0xff]
      %v179 = vld [vmem:[%s1 + $0x8] sm:$0xff]
      %v180 = vld [vmem:[%s1 + $0x10] sm:$0xff]
      %v181 = vld [vmem:[%s1 + $0x18] sm:$0xff]
      %v182 = vld [vmem:[%s2] sm:$0x1]
      %v184 = vlaneseq
      %v185 = vshrl.u32 %v184, 7
      %v186 = vsub.s32 0, %v185
      %v187 = vrot.slane %v182, %v186
      %vm189 = vcmask 261120
      %v191 = vsel %vm189, %v174, 0
      %v194 = vsel %vm189, %v175, 0
      %v197 = vsel %vm189, %v176, 0
      %v200 = vsel %vm189, %v177, 0
      %202 = vmatprep.subr.mxu0 0.0
      %203 = vmatpush1.msra.mxu0 0.0
      %204 = vmatprep.subr.mxu0 0.0
      %205 = vmatpush1.msra.mxu0 0.0
      %206 = vmatprep.subr.mxu0 0.0
      %207 = vmatpush1.msra.mxu0 0.0
      %208 = vmatprep.subr.mxu0 0.0
      %209 = vmatpush1.msra.mxu0 0.0
      %210 = vmatprep.subr.mxu0 0.0
      %211 = vmatpush1.msra.mxu0 0.0
      %212 = vmatprep.subr.mxu0 0.0
      %213 = vmatpush1.msra.mxu0 0.0
      %214 = vmatprep.subr.mxu0 0.0
      %215 = vmatpush1.msra.mxu0 0.0
      %216 = vmatprep.subr.mxu0 0.0
      %217 = vmatpush1.msra.mxu0 0.0
      %218 = vmatprep.subr.mxu0 0.0
      %219 = vmatpush1.msra.mxu0 0.0
      %220 = vmatprep.subr.mxu0 0.0
      %221 = vmatpush1.msra.mxu0 0.0
      %222 = vmatprep.subr.mxu0 0.0
      %223 = vmatpush1.msra.mxu0 0.0
      %224 = vmatprep.subr.mxu0 0.0
      %225 = vmatpush1.msra.mxu0 0.0
      %226 = vmatprep.subr.mxu0 0.0
      %227 = vmatpush1.msra.mxu0 %v181
      %228 = vmatprep.subr.mxu0 0.0
      %229 = vmatpush1.msra.mxu0 %v180
      %230 = vmatprep.subr.mxu0 0.0
      %231 = vmatpush1.msra.mxu0 %v179
      %232 = vmatprep.subr.mxu0 0.0
      %233 = vmatpush1.msra.mxu0 %v178
      %234 = vmatprep.subr.mxu0 0.0
      %235 = vmatpush2.msra.mxu0 0.0
      %236 = vmatprep.subr.mxu0 0.0
      %237 = vmatpush2.msra.mxu0 0.0
      %238 = vmatprep.subr.mxu0 0.0
      %239 = vmatpush2.msra.mxu0 0.0
      %240 = vmatprep.subr.mxu0 0.0
      %241 = vmatpush2.msra.mxu0 0.0
      %242 = vmatprep.subr.mxu0 0.0
      %243 = vmatpush2.msra.mxu0 0.0
      %244 = vmatprep.subr.mxu0 0.0
      %245 = vmatpush2.msra.mxu0 0.0
      %246 = vmatprep.subr.mxu0 0.0
      %247 = vmatpush2.msra.mxu0 0.0
      %248 = vmatprep.subr.mxu0 0.0
      %249 = vmatpush2.msra.mxu0 0.0
      %250 = vmatprep.subr.mxu0 0.0
      %251 = vmatpush2.msra.mxu0 0.0
      %252 = vmatprep.subr.mxu0 0.0
      %253 = vmatpush2.msra.mxu0 0.0
      %254 = vmatprep.subr.mxu0 0.0
      %255 = vmatpush2.msra.mxu0 0.0
      %256 = vmatprep.subr.mxu0 0.0
      %257 = vmatpush2.msra.mxu0 0.0
      %258 = vmatprep.subr.mxu0 0.0
      %259 = vmatpush2.msra.mxu0 0.0
      %260 = vmatprep.subr.mxu0 0.0
      %261 = vmatpush2.msra.mxu0 0.0
      %262 = vmatprep.subr.mxu0 0.0
      %263 = vmatpush2.msra.mxu0 0.0
      %264 = vmatprep.subr.mxu0 0.0
      %265 = vmatpush2.msra.mxu0 0.0
      %266 = vmatprep.mubr.f32.mxu0 0.0
      %267 = vmatmul.mubr.f32.gmra.mxu0 %v191
      %v268 = vpop.f32.mrf.mxu0
      %v269 = vadd.f32 %v187, %v268
      %v270 = vpop.f32.mrf.mxu0
      %271 = vmatprep.mubr.f32.mxu0 0.0
      %272 = vmatmul.mubr.f32.gmra.mxu0 %v194
      %v273 = vpop.f32.mrf.mxu0
      %v274 = vadd.f32 %v187, %v273
      %v275 = vpop.f32.mrf.mxu0
      %276 = vmatprep.mubr.f32.mxu0 0.0
      %277 = vmatmul.mubr.f32.gmra.mxu0 %v197
      %v278 = vpop.f32.mrf.mxu0
      %v279 = vadd.f32 %v187, %v278
      %v280 = vpop.f32.mrf.mxu0
      %281 = vmatprep.mubr.f32.mxu0 0.0
      %282 = vmatmul.mubr.f32.gmra.mxu0 %v200
      %v283 = vpop.f32.mrf.mxu0
      %v284 = vadd.f32 %v187, %v283
      %v285 = vpop.f32.mrf.mxu0
      %286 = vdwg.mxu0
      %v287 = vlaneseq
      %v288 = vand.u32 %v287, 127
      %vm289 = vcmp.lt.s32.totalorder %v288, 32
      %v290 = vsel %vm289, 1, 0
      %v291 = vcvt.s32.f32 %v290
      %vm292 = vcmp.ge.s32.totalorder %v288, 32
      %vm293 = vcmp.lt.s32.totalorder %v288, 48
      %vm294 = vmand %vm292, %vm293
      %v295 = vsel %vm294, 1, 0
      %v296 = vcvt.s32.f32 %v295
      %vm297 = vcmp.ge.s32.totalorder %v288, 48
      %vm298 = vcmp.lt.s32.totalorder %v288, 64
      %vm299 = vmand %vm297, %vm298
      %v300 = vsel %vm299, 1, 0
      %v301 = vcvt.s32.f32 %v300
      %vm302 = vcmp.ge.f32.partialorder %v269, 0.5
      %vm303 = vcmp.ge.f32.partialorder %v274, 0.5
      %vm304 = vcmp.ge.f32.partialorder %v279, 0.5
      %vm305 = vcmp.ge.f32.partialorder %v284, 0.5
      %v306 = vsel %vm302, 1.0, 0.0
      %v307 = vsel %vm303, 1.0, 0.0
      %v308 = vsel %vm304, 1.0, 0.0
      %v309 = vsel %vm305, 1.0, 0.0
      %v310 = vmax.f32 %v269, 0.0
      %v311 = vmax.f32 %v274, 0.0
      %v312 = vmax.f32 %v279, 0.0
      %v313 = vmax.f32 %v284, 0.0
      %v314 = vmin.f32 %v310, 0.5
      %v315 = vmin.f32 %v311, 0.5
      %v316 = vmin.f32 %v312, 0.5
      %v317 = vmin.f32 %v313, 0.5
      %v318 = vmul.f32 %v291, %v306
      %v319 = vmul.f32 %v291, %v307
      %v320 = vmul.f32 %v291, %v308
      %v321 = vmul.f32 %v291, %v309
      %v322 = vmul.f32 %v296, %v314
      %v323 = vmul.f32 %v296, %v315
      %v324 = vmul.f32 %v296, %v316
      %v325 = vmul.f32 %v296, %v317
      %v326 = vadd.f32 %v318, %v322
      %v327 = vadd.f32 %v319, %v323
      %v328 = vadd.f32 %v320, %v324
      %v329 = vadd.f32 %v321, %v325
      %v330 = vmul.f32 %v301, %v269
      %v331 = vmul.f32 %v301, %v274
      %v332 = vmul.f32 %v301, %v279
      %v333 = vmul.f32 %v301, %v284
      %v334 = vadd.f32 %v326, %v330
      %v335 = vadd.f32 %v327, %v331
      %v336 = vadd.f32 %v328, %v332
      %v337 = vadd.f32 %v329, %v333
      %342 = vrot.lane.b32.xlu0 %v334, 112
      %v343 = vpop.permute.xlu0 %342
      %344 = vrot.lane.b32.xlu0 %v335, 112
      %v345 = vpop.permute.xlu0 %344
      %346 = vrot.lane.b32.xlu0 %v336, 112
      %v347 = vpop.permute.xlu0 %346
      %348 = vrot.lane.b32.xlu0 %v337, 112
      %v349 = vpop.permute.xlu0 %348
      %v354 = vadd.f32 %v334, %v343
      %v355 = vadd.f32 %v335, %v345
      %v356 = vadd.f32 %v336, %v347
      %v357 = vadd.f32 %v337, %v349
      %358 = vrot.lane.b32.xlu0 %v334, 96
      %v359 = vpop.permute.xlu0 %358
      %360 = vrot.lane.b32.xlu0 %v335, 96
      %v361 = vpop.permute.xlu0 %360
      %362 = vrot.lane.b32.xlu0 %v336, 96
      %v363 = vpop.permute.xlu0 %362
      %364 = vrot.lane.b32.xlu0 %v337, 96
      %v365 = vpop.permute.xlu0 %364
      %v370 = vadd.f32 %v354, %v359
      %v371 = vadd.f32 %v355, %v361
      %v372 = vadd.f32 %v356, %v363
      %v373 = vadd.f32 %v357, %v365
      %374 = vrot.lane.b32.xlu0 %v334, 80
      %v375 = vpop.permute.xlu0 %374
      %376 = vrot.lane.b32.xlu0 %v335, 80
      %v377 = vpop.permute.xlu0 %376
      %378 = vrot.lane.b32.xlu0 %v336, 80
      %v379 = vpop.permute.xlu0 %378
      %380 = vrot.lane.b32.xlu0 %v337, 80
      %v381 = vpop.permute.xlu0 %380
      %v386 = vadd.f32 %v370, %v375
      %v387 = vadd.f32 %v371, %v377
      %v388 = vadd.f32 %v372, %v379
      %v389 = vadd.f32 %v373, %v381
      %v390 = vmax.f32 %v386, 0.0
      %v391 = vmax.f32 %v387, 0.0
      %v392 = vmax.f32 %v388, 0.0
      %v393 = vmax.f32 %v389, 0.0
      %vm394 = vcmask 130048
      %395 = vst.msk [vmem:[%s172] sm:$0xff] %vm394, %v390
      %396 = vst.msk [vmem:[%s172 + $0x8] sm:$0xff] %vm394, %v391
      %397 = vst.msk [vmem:[%s172 + $0x10] sm:$0xff] %vm394, %v392
      %398 = vst.msk [vmem:[%s172 + $0x18] sm:$0xff] %vm394, %v393
      %s399 = smul.u32 4, %s14
      %p400 = scmp.lt.s32.totalorder %s399, 15
      %s401 = scalar_select %p400, %s399, 15
      %s402 = smul.addr %s401, 8
      %s403 = scalar_lea.vmem %s3, %s402
      // Predicated region
      $region33: #{tpu_custom_call.1} parent=31 // pred_check
        %p404 = pneg %p100
      $region34: #{tpu_custom_call.1} parent=31 // pred_check_branch
        %406 = sbr.rel (%p404) target = $region36
      $region35: #{tpu_custom_call.1} parent=31 // pred_region
        %s407 = smul.u32 4, %s14
      $region36: #{tpu_custom_call.1} parent=31 // pred_fallthru
        _
    $region32: #{tpu_custom_call.1} parent=5 // pred_fallthru
      _
    %p408 = scmp.le.s32.totalorder 2, %s9
    // Predicated region
    $region37: #{tpu_custom_call.1} parent=5 // pred_check
      %p409 = pneg %p408
    $region38: #{tpu_custom_call.1} parent=5 // pred_check_branch
      %411 = sbr.rel (%p409) target = $region40
    $region39: #{tpu_custom_call.1} parent=5 // pred_region
      %s412 = ssub.s32 %s9, 2
      // Predicated region
      $region41: #{tpu_custom_call.1} parent=39 // pred_check
        %p413 = pneg %p106
      $region42: #{tpu_custom_call.1} parent=39 // pred_check_branch
        %415 = sbr.rel (%p413) target = $region44
      $region43: #{tpu_custom_call.1} parent=39 // pred_region
        %s416 = smul.u32 4, %s15
        %p417 = scmp.lt.s32.totalorder %s416, 15
        %s418 = scalar_select %p417, %s416, 15
        %s419 = smul.addr %s418, 8
        %s420 = scalar_lea.vmem %s3, %s419
      $region44: #{tpu_custom_call.1} parent=39 // pred_fallthru
        _
    $region40: #{tpu_custom_call.1} parent=5 // pred_fallthru
      _
  $region6: #{tpu_custom_call.1} parent=0 // loop_footer
    %s13 = sadd.s32 1, %s9
  $region7: #{tpu_custom_call.1} parent=0 // loop_footer_branch
    %8 = sbr.rel target = $region3
  $region8: #{tpu_custom_call.1} parent=0 // loop_exit
    _

</llo_original>
